<compile_context>
chip_gen: v7x
topology: tpu7x:2x2x1
jax: 0.10.0
libtpu: 0.0.40
codegen_flags: <defaults>
</compile_context>

<pallas_src>
import jax
import jax.numpy as jnp
from jax.experimental import pallas as pl
from jax.experimental.pallas import tpu as pltpu

_HIGHEST = jax.lax.Precision.HIGHEST


# ---------------------------------------------------------------------------
# Pallas kernel: fused [obs ; hidden-stack] @ w_core (no stack materialized).
# ---------------------------------------------------------------------------
def _fused_stack_core_kernel(obs_ref, hid_ref, w_obs_ref, w_hid_ref, out_ref):
    """x = concat([obs, hidden], -2).reshape(Bt, -1) @ w_core, fused.

    obs_ref  : (Bt, N)      new observation embedding
    hid_ref  : (Bt, D, N)   stacked hidden state
    w_obs_ref: (N, C)       w_core rows multiplying the obs slot
    w_hid_ref: (D, N, C)    w_core rows multiplying hidden slot d
    out_ref  : (Bt, C)      core feature
    """
    acc = jnp.dot(obs_ref[...], w_obs_ref[...],
                  preferred_element_type=jnp.float32)
    depth = hid_ref.shape[1]
    for d in range(depth):            # static unroll; temporal depth is small
        acc += jnp.dot(hid_ref[:, d, :], w_hid_ref[d],
                       preferred_element_type=jnp.float32)
    out_ref[...] = acc.astype(out_ref.dtype)


def _choose_block_batch(B, tile_bytes, budget=16 << 20):
    """Largest batch block that divides B and keeps the per-step VMEM
    footprint under budget.

    Prefers a single grid step (grid steps are a serial loop on single-TC
    v5e/v6e, ~0.35us fixed overhead each; nothing worth sharing across v7x's
    two TCs at these sizes).  When splitting is required, blocks are kept
    multiples of 8 so the 2-D (batch, feature) blocks satisfy the (8, 128)
    sublane rule."""
    candidates = [bt for bt in range(B, 0, -1)
                  if B % bt == 0 and (bt == B or bt % 8 == 0)]
    for bt in candidates:
        if tile_bytes(bt) <= budget:
            return bt
    return candidates[-1]


def fused_stack_core_matmul(obs_embed, hidden, w_core, *, block_batch=None):
    """Fused `concat([obs_embed[:, None], hidden], -2).reshape(B, -1) @ w_core`.

    obs_embed: (B, N); hidden: (B, D, N); w_core: ((D+1)*N, C) -> (B, C)
    """
    B, N = obs_embed.shape
    Bh, D, Nh = hidden.shape
    K, C = w_core.shape
    assert B == Bh and N == Nh, "batch / feature dims must match"
    assert K == (D + 1) * N, "w_core rows must equal (D+1)*N"
    assert obs_embed.dtype == hidden.dtype

    act_isz = jnp.dtype(obs_embed.dtype).itemsize
    w_isz = jnp.dtype(w_core.dtype).itemsize
    w_bytes = (N * C + D * N * C) * w_isz

    def tile_bytes(bt):  # double-buffered inputs + outputs, per grid step
        return 2 * ((bt * N + bt * D * N) * act_isz + w_bytes) \
             + 2 * bt * C * w_isz

    if block_batch is None:
        block_batch = _choose_block_batch(B, tile_bytes)
    assert B % block_batch == 0, "block_batch must divide B"

    # Split the core weight once in the wrapper: rows for the obs slot and a
    # (D, N, C) view of the rows for each hidden slot (row-major, no copy cost
    # beyond the slice).
    w_obs_part = w_core[:N]                      # (N, C)
    w_hid_part = w_core[N:].reshape(D, N, C)     # (D, N, C)

    vmem_limit = int(min(32 << 20,
                         max(4 << 20, 5 * tile_bytes(block_batch) // 4)))

    return pl.pallas_call(
        _fused_stack_core_kernel,
        out_shape=jax.ShapeDtypeStruct((B, C), w_core.dtype),
        grid_spec=pltpu.PrefetchScalarGridSpec(
            num_scalar_prefetch=0,
            grid=(B // block_batch,),
            in_specs=[
                pl.BlockSpec((block_batch, N), lambda b: (b, 0)),
                pl.BlockSpec((block_batch, D, N), lambda b: (b, 0, 0)),
                # Weight blocks revisit the same index -> fetched once, reused.
                pl.BlockSpec((N, C), lambda b: (0, 0)),
                pl.BlockSpec((D, N, C), lambda b: (0, 0, 0)),
            ],
            out_specs=pl.BlockSpec((block_batch, C), lambda b: (b, 0)),
        ),
        compiler_params=pltpu.CompilerParams(
            dimension_semantics=("parallel",),
            vmem_limit_bytes=vmem_limit,
        ),
    )(obs_embed, hidden, w_obs_part, w_hid_part)


# ---------------------------------------------------------------------------
# TemporalPolicyValueCommonNet forward (concrete small instantiation).
# The injected sub-modules are abstract nn.Modules in the spec; here they are
# small dense layers, with the temporal core built around the fused kernel.
# ---------------------------------------------------------------------------
def init_params(key, obs_dim, embed_dim, depth, core_dim, action_dim):
    ks = jax.random.split(key, 4)

    def lin(k, shape, fan_in):
        return jax.random.normal(k, shape, jnp.float32) / jnp.sqrt(fan_in)

    return {
        "w_obs": lin(ks[0], (obs_dim, embed_dim), obs_dim),
        "w_core": lin(ks[1], ((depth + 1) * embed_dim, core_dim),
                      (depth + 1) * embed_dim),
        "w_policy": lin(ks[2], (core_dim, action_dim), core_dim),
        "w_value": lin(ks[3], (core_dim, 1), core_dim),
    }


def temporal_policy_value_common_net_forward(params, observation, hidden):
    """observation: (B, obs_dim); hidden: (B, D, N).

    Returns (policy_logits, value, new_hidden), mirroring
    TemporalPolicyValueCommonNet.forward.
    """
    B = observation.shape[0]
    # observation_flatten
    obs_embed = jnp.dot(observation.reshape(B, -1), params["w_obs"],
                        precision=_HIGHEST)                               # (B, N)
    # core_model: the (B, D+1, N) stack is never materialized — the concat is
    # fused into the core matmul (Pallas kernel).  The shifted stack the
    # module must return is built directly from its two pieces.
    x = fused_stack_core_matmul(obs_embed, hidden, params["w_core"])      # (B, C)
    new_hidden = jnp.concatenate([obs_embed[:, None, :], hidden[:, :-1, :]],
                                 axis=1)                                  # (B, D, N)
    # policy_head / value_head: one lane-denser matmul, split afterwards.
    # TODO(synk): torch.distributions.Distribution has no JAX-array equivalent
    # here; the policy head returns raw logits instead.
    w_pv = jnp.concatenate([params["w_policy"], params["w_value"]], axis=1)
    pv = jnp.dot(x, w_pv, precision=_HIGHEST)
    action_dim = params["w_policy"].shape[1]
    policy_logits = pv[:, :action_dim]
    value = pv[:, action_dim]
    return policy_logits, value, new_hidden


if __name__ == "__main__":
    key = jax.random.PRNGKey(0)
    k_obs, k_hid, k_par = jax.random.split(key, 3)

    # Small shapes: batch=16, hidden stack depth D=7, embed dim N=128.
    B, D, N = 16, 7, 128
    OBS_DIM, CORE_DIM, ACTION_DIM = 32, 64, 8

    observation = jax.random.normal(k_obs, (B, OBS_DIM), jnp.float32)
    hidden = jax.random.normal(k_hid, (B, D, N), jnp.float32)
    params = init_params(k_par, OBS_DIM, N, D, CORE_DIM, ACTION_DIM)

    # ---- fused-kernel check against a pure-JAX reference --------------------
    obs_embed = jnp.dot(observation, params["w_obs"], precision=_HIGHEST)
    stacked_ref = jnp.concatenate([obs_embed[:, None, :], hidden], axis=1)
    x_ref = jnp.dot(stacked_ref.reshape(B, -1), params["w_core"],
                    precision=_HIGHEST)

    x = jax.block_until_ready(
        fused_stack_core_matmul(obs_embed, hidden, params["w_core"]))
    assert x.shape == (B, CORE_DIM)
    assert jnp.allclose(x, x_ref, atol=1e-3, rtol=1e-3), \
        "fused core matmul mismatch"

    # ---- full module forward -------------------------------------------------
    fwd = jax.jit(temporal_policy_value_common_net_forward)
    logits, value, new_hidden = jax.block_until_ready(
        fwd(params, observation, hidden))

    logits_ref = jnp.dot(x_ref, params["w_policy"], precision=_HIGHEST)
    value_ref = jnp.dot(x_ref, params["w_value"], precision=_HIGHEST)[:, 0]
    hidden_ref = stacked_ref[:, :-1, :]

    assert logits.shape == (B, ACTION_DIM)
    assert value.shape == (B,)
    assert new_hidden.shape == (B, D, N)
    assert jnp.allclose(logits, logits_ref, atol=2e-3, rtol=2e-3), \
        "policy head mismatch"
    assert jnp.allclose(value, value_ref, atol=2e-3, rtol=2e-3), \
        "value head mismatch"
    assert jnp.allclose(new_hidden, hidden_ref), "hidden mismatch"

    print("KERNEL_OK")
</pallas_src>

<mosaic_0001>
module attributes {stable_mosaic.version = 11 : i64} {
  func.func @_fused_stack_core_kernel(%arg0: i32, %arg1: memref<16x128xf32, #tpu.memory_space<vmem>>, %arg2: memref<16x7x128xf32, #tpu.memory_space<vmem>>, %arg3: memref<128x64xf32, #tpu.memory_space<vmem>>, %arg4: memref<7x128x64xf32, #tpu.memory_space<vmem>>, %arg5: memref<16x64xf32, #tpu.memory_space<vmem>>) attributes {dimension_semantics = [#tpu.dimension_semantics<parallel>], iteration_bounds = array<i64: 1>, scalar_prefetch = 0 : i64, scratch_operands = 0 : i64, tpu.core_type = #tpu.core_type<tc>, window_params = [{transform_indices = @transform_0, window_bounds = array<i64: 16, 128>}, {transform_indices = @transform_1, window_bounds = array<i64: 16, 7, 128>}, {pipeline_mode = #tpu.pipeline_mode<synchronous>, transform_indices = @transform_2, window_bounds = array<i64: 128, 64>}, {pipeline_mode = #tpu.pipeline_mode<synchronous>, transform_indices = @transform_3, window_bounds = array<i64: 7, 128, 64>}, {transform_indices = @transform_4, window_bounds = array<i64: 16, 64>}]} {
    %c0 = arith.constant 0 : index
    %c0_0 = arith.constant 0 : index
    %0 = vector.load %arg1[%c0, %c0_0] : memref<16x128xf32, #tpu.memory_space<vmem>>, vector<16x128xf32>
    %c0_1 = arith.constant 0 : index
    %c0_2 = arith.constant 0 : index
    %1 = vector.load %arg3[%c0_1, %c0_2] : memref<128x64xf32, #tpu.memory_space<vmem>>, vector<128x64xf32>
    %cst = arith.constant dense<0.000000e+00> : vector<16x64xf32>
    %2 = tpu.matmul %0, %1, %cst {dimension_numbers = #tpu.dot_dimension_numbers<[1], [0], [0], [1], [0, 0, 1, 1], [], []>} : vector<16x128xf32>, vector<128x64xf32>, vector<16x64xf32> -> vector<16x64xf32>
    %c0_3 = arith.constant 0 : index
    %c0_4 = arith.constant 0 : index
    %c0_5 = arith.constant 0 : index
    %3 = vector.load %arg2[%c0_3, %c0_4, %c0_5] : memref<16x7x128xf32, #tpu.memory_space<vmem>>, vector<16x1x128xf32>
    %4 = vector.shape_cast %3 : vector<16x1x128xf32> to vector<16x128xf32>
    %c0_6 = arith.constant 0 : index
    %c0_7 = arith.constant 0 : index
    %c0_8 = arith.constant 0 : index
    %5 = vector.load %arg4[%c0_6, %c0_7, %c0_8] : memref<7x128x64xf32, #tpu.memory_space<vmem>>, vector<1x128x64xf32>
    %6 = vector.shape_cast %5 : vector<1x128x64xf32> to vector<128x64xf32>
    %cst_9 = arith.constant dense<0.000000e+00> : vector<16x64xf32>
    %7 = tpu.matmul %4, %6, %cst_9 {dimension_numbers = #tpu.dot_dimension_numbers<[1], [0], [0], [1], [0, 0, 1, 1], [], []>} : vector<16x128xf32>, vector<128x64xf32>, vector<16x64xf32> -> vector<16x64xf32>
    %8 = arith.addf %2, %7 : vector<16x64xf32>
    %c0_10 = arith.constant 0 : index
    %c1 = arith.constant 1 : index
    %c0_11 = arith.constant 0 : index
    %9 = vector.load %arg2[%c0_10, %c1, %c0_11] : memref<16x7x128xf32, #tpu.memory_space<vmem>>, vector<16x1x128xf32>
    %10 = vector.shape_cast %9 : vector<16x1x128xf32> to vector<16x128xf32>
    %c1_12 = arith.constant 1 : index
    %c0_13 = arith.constant 0 : index
    %c0_14 = arith.constant 0 : index
    %11 = vector.load %arg4[%c1_12, %c0_13, %c0_14] : memref<7x128x64xf32, #tpu.memory_space<vmem>>, vector<1x128x64xf32>
    %12 = vector.shape_cast %11 : vector<1x128x64xf32> to vector<128x64xf32>
    %cst_15 = arith.constant dense<0.000000e+00> : vector<16x64xf32>
    %13 = tpu.matmul %10, %12, %cst_15 {dimension_numbers = #tpu.dot_dimension_numbers<[1], [0], [0], [1], [0, 0, 1, 1], [], []>} : vector<16x128xf32>, vector<128x64xf32>, vector<16x64xf32> -> vector<16x64xf32>
    %14 = arith.addf %8, %13 : vector<16x64xf32>
    %c0_16 = arith.constant 0 : index
    %c2 = arith.constant 2 : index
    %c0_17 = arith.constant 0 : index
    %15 = vector.load %arg2[%c0_16, %c2, %c0_17] : memref<16x7x128xf32, #tpu.memory_space<vmem>>, vector<16x1x128xf32>
    %16 = vector.shape_cast %15 : vector<16x1x128xf32> to vector<16x128xf32>
    %c2_18 = arith.constant 2 : index
    %c0_19 = arith.constant 0 : index
    %c0_20 = arith.constant 0 : index
    %17 = vector.load %arg4[%c2_18, %c0_19, %c0_20] : memref<7x128x64xf32, #tpu.memory_space<vmem>>, vector<1x128x64xf32>
    %18 = vector.shape_cast %17 : vector<1x128x64xf32> to vector<128x64xf32>
    %cst_21 = arith.constant dense<0.000000e+00> : vector<16x64xf32>
    %19 = tpu.matmul %16, %18, %cst_21 {dimension_numbers = #tpu.dot_dimension_numbers<[1], [0], [0], [1], [0, 0, 1, 1], [], []>} : vector<16x128xf32>, vector<128x64xf32>, vector<16x64xf32> -> vector<16x64xf32>
    %20 = arith.addf %14, %19 : vector<16x64xf32>
    %c0_22 = arith.constant 0 : index
    %c3 = arith.constant 3 : index
    %c0_23 = arith.constant 0 : index
    %21 = vector.load %arg2[%c0_22, %c3, %c0_23] : memref<16x7x128xf32, #tpu.memory_space<vmem>>, vector<16x1x128xf32>
    %22 = vector.shape_cast %21 : vector<16x1x128xf32> to vector<16x128xf32>
    %c3_24 = arith.constant 3 : index
    %c0_25 = arith.constant 0 : index
    %c0_26 = arith.constant 0 : index
    %23 = vector.load %arg4[%c3_24, %c0_25, %c0_26] : memref<7x128x64xf32, #tpu.memory_space<vmem>>, vector<1x128x64xf32>
    %24 = vector.shape_cast %23 : vector<1x128x64xf32> to vector<128x64xf32>
    %cst_27 = arith.constant dense<0.000000e+00> : vector<16x64xf32>
    %25 = tpu.matmul %22, %24, %cst_27 {dimension_numbers = #tpu.dot_dimension_numbers<[1], [0], [0], [1], [0, 0, 1, 1], [], []>} : vector<16x128xf32>, vector<128x64xf32>, vector<16x64xf32> -> vector<16x64xf32>
    %26 = arith.addf %20, %25 : vector<16x64xf32>
    %c0_28 = arith.constant 0 : index
    %c4 = arith.constant 4 : index
    %c0_29 = arith.constant 0 : index
    %27 = vector.load %arg2[%c0_28, %c4, %c0_29] : memref<16x7x128xf32, #tpu.memory_space<vmem>>, vector<16x1x128xf32>
    %28 = vector.shape_cast %27 : vector<16x1x128xf32> to vector<16x128xf32>
    %c4_30 = arith.constant 4 : index
    %c0_31 = arith.constant 0 : index
    %c0_32 = arith.constant 0 : index
    %29 = vector.load %arg4[%c4_30, %c0_31, %c0_32] : memref<7x128x64xf32, #tpu.memory_space<vmem>>, vector<1x128x64xf32>
    %30 = vector.shape_cast %29 : vector<1x128x64xf32> to vector<128x64xf32>
    %cst_33 = arith.constant dense<0.000000e+00> : vector<16x64xf32>
    %31 = tpu.matmul %28, %30, %cst_33 {dimension_numbers = #tpu.dot_dimension_numbers<[1], [0], [0], [1], [0, 0, 1, 1], [], []>} : vector<16x128xf32>, vector<128x64xf32>, vector<16x64xf32> -> vector<16x64xf32>
    %32 = arith.addf %26, %31 : vector<16x64xf32>
    %c0_34 = arith.constant 0 : index
    %c5 = arith.constant 5 : index
    %c0_35 = arith.constant 0 : index
    %33 = vector.load %arg2[%c0_34, %c5, %c0_35] : memref<16x7x128xf32, #tpu.memory_space<vmem>>, vector<16x1x128xf32>
    %34 = vector.shape_cast %33 : vector<16x1x128xf32> to vector<16x128xf32>
    %c5_36 = arith.constant 5 : index
    %c0_37 = arith.constant 0 : index
    %c0_38 = arith.constant 0 : index
    %35 = vector.load %arg4[%c5_36, %c0_37, %c0_38] : memref<7x128x64xf32, #tpu.memory_space<vmem>>, vector<1x128x64xf32>
    %36 = vector.shape_cast %35 : vector<1x128x64xf32> to vector<128x64xf32>
    %cst_39 = arith.constant dense<0.000000e+00> : vector<16x64xf32>
    %37 = tpu.matmul %34, %36, %cst_39 {dimension_numbers = #tpu.dot_dimension_numbers<[1], [0], [0], [1], [0, 0, 1, 1], [], []>} : vector<16x128xf32>, vector<128x64xf32>, vector<16x64xf32> -> vector<16x64xf32>
    %38 = arith.addf %32, %37 : vector<16x64xf32>
    %c0_40 = arith.constant 0 : index
    %c6 = arith.constant 6 : index
    %c0_41 = arith.constant 0 : index
    %39 = vector.load %arg2[%c0_40, %c6, %c0_41] : memref<16x7x128xf32, #tpu.memory_space<vmem>>, vector<16x1x128xf32>
    %40 = vector.shape_cast %39 : vector<16x1x128xf32> to vector<16x128xf32>
    %c6_42 = arith.constant 6 : index
    %c0_43 = arith.constant 0 : index
    %c0_44 = arith.constant 0 : index
    %41 = vector.load %arg4[%c6_42, %c0_43, %c0_44] : memref<7x128x64xf32, #tpu.memory_space<vmem>>, vector<1x128x64xf32>
    %42 = vector.shape_cast %41 : vector<1x128x64xf32> to vector<128x64xf32>
    %cst_45 = arith.constant dense<0.000000e+00> : vector<16x64xf32>
    %43 = tpu.matmul %40, %42, %cst_45 {dimension_numbers = #tpu.dot_dimension_numbers<[1], [0], [0], [1], [0, 0, 1, 1], [], []>} : vector<16x128xf32>, vector<128x64xf32>, vector<16x64xf32> -> vector<16x64xf32>
    %44 = arith.addf %38, %43 : vector<16x64xf32>
    %c0_46 = arith.constant 0 : index
    %c0_47 = arith.constant 0 : index
    %45 = vector.load %arg5[%c0_46, %c0_47] : memref<16x64xf32, #tpu.memory_space<vmem>>, vector<16x64xf32>
    tpu.vector_store %arg5[%c0_46, %c0_47], %44 {strides = array<i32>} : memref<16x64xf32, #tpu.memory_space<vmem>>, vector<16x64xf32>,
    return
  }
  func.func @transform_0(%arg0: i32) -> (i32, i32) {
    %c0_i32 = arith.constant 0 : i32
    %c0_i32_0 = arith.constant 0 : i32
    return %arg0, %c0_i32 : i32, i32
  }
  func.func @transform_1(%arg0: i32) -> (i32, i32, i32) {
    %c0_i32 = arith.constant 0 : i32
    %c0_i32_0 = arith.constant 0 : i32
    %c0_i32_1 = arith.constant 0 : i32
    return %arg0, %c0_i32, %c0_i32_0 : i32, i32, i32
  }
  func.func @transform_2(%arg0: i32) -> (i32, i32) {
    %c0_i32 = arith.constant 0 : i32
    %c0_i32_0 = arith.constant 0 : i32
    %c0_i32_1 = arith.constant 0 : i32
    return %c0_i32, %c0_i32_0 : i32, i32
  }
  func.func @transform_3(%arg0: i32) -> (i32, i32, i32) {
    %c0_i32 = arith.constant 0 : i32
    %c0_i32_0 = arith.constant 0 : i32
    %c0_i32_1 = arith.constant 0 : i32
    %c0_i32_2 = arith.constant 0 : i32
    return %c0_i32, %c0_i32_0, %c0_i32_1 : i32, i32, i32
  }
  func.func @transform_4(%arg0: i32) -> (i32, i32) {
    %c0_i32 = arith.constant 0 : i32
    %c0_i32_0 = arith.constant 0 : i32
    return %arg0, %c0_i32 : i32, i32
  }
}

</mosaic_0001>

<llo_original>
// kernel: tpu_custom_call.1
$region0: #{tpu_custom_call.1}
  #allocation0 [shape = 'u32[]', space=smem, size = 0x4, offset = 0x4, fixed_abs, tag = 'smem constant byte address 0x4 - core index']
  #allocation1 [shape = 'u32[144,128]{1,0:T(1,128)}', space=vmem, size = 0x12000, scoped, tag = 'internal scratch']
  %s0 = inlined_call_operand.vmem [shape: f32[16,128], index: 0, kind: input, shape index: {}]
  %s1 = inlined_call_operand.vmem [shape: f32[16,7,128], index: 1, kind: input, shape index: {}]
  %s2 = inlined_call_operand.vmem [shape: f32[128,64], index: 2, kind: input, shape index: {}]
  %s3 = inlined_call_operand.vmem [shape: f32[7,128,64], index: 3, kind: input, shape index: {}]
  %s4 = inlined_call_operand.hbm [shape: f32[16,64], index: 4, kind: output, shape index: {}]
  %s5 = sld [smem:[#allocation0]]
  $region26: #{tpu_custom_call.1} parent=0
    _
  %s7 = ssub.s32 1, %s5
  %s8 = scalar_select 0, %s7, %s5
  $region1: #{tpu_custom_call.1} parent=0
    #allocation2 [shape = 'u8[8192]{0}', space=vmem, size = 0x2000, scoped, tag = 'output window, operand 0, single buffered']
    #allocation3 [shape = 's32[1]{0}', space=sflag, size = 0x4, scoped, tag = 'scoped memory for tpu_custom_call.1']
    %9 = vsyncpa [#allocation3], 0
    // Predicated region
    $region2: #{tpu_custom_call.1} parent=1 // pred_check
      _
    $region3: #{tpu_custom_call.1} parent=1 // pred_check_branch
      %11 = sbr.rel (0) target = $region5
    $region4: #{tpu_custom_call.1} parent=1 // pred_region
      _
    $region5: #{tpu_custom_call.1} parent=1 // pred_fallthru
      _
    // Predicated region
    $region6: #{tpu_custom_call.1} parent=1 // pred_check
      _
    $region7: #{tpu_custom_call.1} parent=1 // pred_check_branch
      %13 = sbr.rel (0) target = $region9
    $region8: #{tpu_custom_call.1} parent=1 // pred_region
      _
    $region9: #{tpu_custom_call.1} parent=1 // pred_fallthru
      _
    // Predicated region
    $region10: #{tpu_custom_call.1} parent=1 // pred_check
      _
    $region11: #{tpu_custom_call.1} parent=1 // pred_check_branch
      %15 = sbr.rel (0) target = $region13
    $region12: #{tpu_custom_call.1} parent=1 // pred_region
      _
    $region13: #{tpu_custom_call.1} parent=1 // pred_fallthru
      _
    // Predicated region
    $region14: #{tpu_custom_call.1} parent=1 // pred_check
      _
    $region15: #{tpu_custom_call.1} parent=1 // pred_check_branch
      %17 = sbr.rel (0) target = $region17
    $region16: #{tpu_custom_call.1} parent=1 // pred_region
      _
    $region17: #{tpu_custom_call.1} parent=1 // pred_fallthru
      _
    %v18 = vld [vmem:[%s0] sm:$0xff]
    %v19 = vld [vmem:[%s0 + $0x8] sm:$0xff]
    %v20 = vld [vmem:[%s2] sm:$0xff]
    %v21 = vld [vmem:[%s2 + $0x8] sm:$0xff]
    %v22 = vld [vmem:[%s2 + $0x10] sm:$0xff]
    %v23 = vld [vmem:[%s2 + $0x18] sm:$0xff]
    %v24 = vld [vmem:[%s2 + $0x20] sm:$0xff]
    %v25 = vld [vmem:[%s2 + $0x28] sm:$0xff]
    %v26 = vld [vmem:[%s2 + $0x30] sm:$0xff]
    %v27 = vld [vmem:[%s2 + $0x38] sm:$0xff]
    %v28 = vld [vmem:[%s2 + $0x40] sm:$0xff]
    %v29 = vld [vmem:[%s2 + $0x48] sm:$0xff]
    %v30 = vld [vmem:[%s2 + $0x50] sm:$0xff]
    %v31 = vld [vmem:[%s2 + $0x58] sm:$0xff]
    %v32 = vld [vmem:[%s2 + $0x60] sm:$0xff]
    %v33 = vld [vmem:[%s2 + $0x68] sm:$0xff]
    %v34 = vld [vmem:[%s2 + $0x70] sm:$0xff]
    %v35 = vld [vmem:[%s2 + $0x78] sm:$0xff]
    %v36 = vld [vmem:[%s1] sm:$0x1]
    %v37 = vld [vmem:[%s1 + $0x8] sm:$0x1]
    %v38 = vld [vmem:[%s1 + $0x10] sm:$0x1]
    %v39 = vld [vmem:[%s1 + $0x18] sm:$0x1]
    %v40 = vld [vmem:[%s1 + $0x20] sm:$0x1]
    %v41 = vld [vmem:[%s1 + $0x28] sm:$0x1]
    %v42 = vld [vmem:[%s1 + $0x30] sm:$0x1]
    %v43 = vld [vmem:[%s1 + $0x38] sm:$0x1]
    %v44 = vld [vmem:[%s1 + $0x40] sm:$0x1]
    %v45 = vld [vmem:[%s1 + $0x48] sm:$0x1]
    %v46 = vld [vmem:[%s1 + $0x50] sm:$0x1]
    %v47 = vld [vmem:[%s1 + $0x58] sm:$0x1]
    %v48 = vld [vmem:[%s1 + $0x60] sm:$0x1]
    %v49 = vld [vmem:[%s1 + $0x68] sm:$0x1]
    %v50 = vld [vmem:[%s1 + $0x70] sm:$0x1]
    %v51 = vld [vmem:[%s1 + $0x78] sm:$0x1]
    %v52 = vld [vmem:[%s3] sm:$0xff]
    %v53 = vld [vmem:[%s3 + $0x8] sm:$0xff]
    %v54 = vld [vmem:[%s3 + $0x10] sm:$0xff]
    %v55 = vld [vmem:[%s3 + $0x18] sm:$0xff]
    %v56 = vld [vmem:[%s3 + $0x20] sm:$0xff]
    %v57 = vld [vmem:[%s3 + $0x28] sm:$0xff]
    %v58 = vld [vmem:[%s3 + $0x30] sm:$0xff]
    %v59 = vld [vmem:[%s3 + $0x38] sm:$0xff]
    %v60 = vld [vmem:[%s3 + $0x40] sm:$0xff]
    %v61 = vld [vmem:[%s3 + $0x48] sm:$0xff]
    %v62 = vld [vmem:[%s3 + $0x50] sm:$0xff]
    %v63 = vld [vmem:[%s3 + $0x58] sm:$0xff]
    %v64 = vld [vmem:[%s3 + $0x60] sm:$0xff]
    %v65 = vld [vmem:[%s3 + $0x68] sm:$0xff]
    %v66 = vld [vmem:[%s3 + $0x70] sm:$0xff]
    %v67 = vld [vmem:[%s3 + $0x78] sm:$0xff]
    %v84 = vrot.slane %v37, 7
    %vm85 = vcmask 1041409
    %v86 = vsel %vm85, %v84, %v36
    %v87 = vrot.slane %v38, 6
    %vm88 = vcmask 1042434
    %v89 = vsel %vm88, %v87, %v86
    %v90 = vrot.slane %v39, 5
    %vm91 = vcmask 1043459
    %v92 = vsel %vm91, %v90, %v89
    %v93 = vrot.slane %v40, 4
    %vm94 = vcmask 1044484
    %v95 = vsel %vm94, %v93, %v92
    %v96 = vrot.slane %v41, 3
    %vm97 = vcmask 1045509
    %v98 = vsel %vm97, %v96, %v95
    %v99 = vrot.slane %v42, 2
    %vm100 = vcmask 1046534
    %v101 = vsel %vm100, %v99, %v98
    %v102 = vrot.slane %v43, 1
    %vm103 = vcmask 1047559
    %v104 = vsel %vm103, %v102, %v101
    %v105 = vrot.slane %v45, 7
    %v106 = vsel %vm85, %v105, %v44
    %v107 = vrot.slane %v46, 6
    %v108 = vsel %vm88, %v107, %v106
    %v109 = vrot.slane %v47, 5
    %v110 = vsel %vm91, %v109, %v108
    %v111 = vrot.slane %v48, 4
    %v112 = vsel %vm94, %v111, %v110
    %v113 = vrot.slane %v49, 3
    %v114 = vsel %vm97, %v113, %v112
    %v115 = vrot.slane %v50, 2
    %v116 = vsel %vm100, %v115, %v114
    %v117 = vrot.slane %v51, 1
    %v118 = vsel %vm103, %v117, %v116
    %121 = vmatprep.subr.mxu0 0.0
    %122 = vmatpush1.msra.mxu0 %v52
    %123 = vmatprep.subr.mxu0 0.0
    %124 = vmatpush1.msra.mxu0 %v53
    %125 = vmatprep.subr.mxu0 0.0
    %126 = vmatpush1.msra.mxu0 %v54
    %127 = vmatprep.subr.mxu0 0.0
    %128 = vmatpush1.msra.mxu0 %v55
    %129 = vmatprep.subr.mxu0 0.0
    %130 = vmatpush1.msra.mxu0 %v56
    %131 = vmatprep.subr.mxu0 0.0
    %132 = vmatpush1.msra.mxu0 %v57
    %133 = vmatprep.subr.mxu0 0.0
    %134 = vmatpush1.msra.mxu0 %v58
    %135 = vmatprep.subr.mxu0 0.0
    %136 = vmatpush1.msra.mxu0 %v59
    %137 = vmatprep.subr.mxu0 0.0
    %138 = vmatpush1.msra.mxu0 %v60
    %139 = vmatprep.subr.mxu0 0.0
    %140 = vmatpush1.msra.mxu0 %v61
    %141 = vmatprep.subr.mxu0 0.0
    %142 = vmatpush1.msra.mxu0 %v62
    %143 = vmatprep.subr.mxu0 0.0
    %144 = vmatpush1.msra.mxu0 %v63
    %145 = vmatprep.subr.mxu0 0.0
    %146 = vmatpush1.msra.mxu0 %v64
    %147 = vmatprep.subr.mxu0 0.0
    %148 = vmatpush1.msra.mxu0 %v65
    %149 = vmatprep.subr.mxu0 0.0
    %150 = vmatpush1.msra.mxu0 %v66
    %151 = vmatprep.subr.mxu0 0.0
    %152 = vmatpush1.msra.mxu0 %v67
    %153 = vmatprep.subr.mxu0 0.0
    %154 = vmatpush1.msra.mxu0 0.0
    %155 = vmatprep.subr.mxu0 0.0
    %156 = vmatpush1.msra.mxu0 0.0
    %157 = vmatprep.subr.mxu0 0.0
    %158 = vmatpush1.msra.mxu0 0.0
    %159 = vmatprep.subr.mxu0 0.0
    %160 = vmatpush1.msra.mxu0 0.0
    %161 = vmatprep.subr.mxu0 0.0
    %162 = vmatpush1.msra.mxu0 0.0
    %163 = vmatprep.subr.mxu0 0.0
    %164 = vmatpush1.msra.mxu0 0.0
    %165 = vmatprep.subr.mxu0 0.0
    %166 = vmatpush1.msra.mxu0 0.0
    %167 = vmatprep.subr.mxu0 0.0
    %168 = vmatpush1.msra.mxu0 0.0
    %169 = vmatprep.subr.mxu0 0.0
    %170 = vmatpush1.msra.mxu0 0.0
    %171 = vmatprep.subr.mxu0 0.0
    %172 = vmatpush1.msra.mxu0 0.0
    %173 = vmatprep.subr.mxu0 0.0
    %174 = vmatpush1.msra.mxu0 0.0
    %175 = vmatprep.subr.mxu0 0.0
    %176 = vmatpush1.msra.mxu0 0.0
    %177 = vmatprep.subr.mxu0 0.0
    %178 = vmatpush1.msra.mxu0 0.0
    %179 = vmatprep.subr.mxu0 0.0
    %180 = vmatpush1.msra.mxu0 0.0
    %181 = vmatprep.subr.mxu0 0.0
    %182 = vmatpush1.msra.mxu0 0.0
    %183 = vmatprep.subr.mxu0 0.0
    %184 = vmatpush1.msra.mxu0 0.0
    %185 = vmatprep.mubr.f32.mxu0 0.0
    %186 = vmatmul.mubr.f32.gmra.mrb[0].mxu0 %v104
    %v187 = vpop.f32.mrb[0].mxu0
    %v188 = vadd.f32 0.0, %v187
    %v189 = vpop.f32.mrb[0].mxu0
    %190 = vmatprep.mubr.f32.mxu0 0.0
    %191 = vmatmul.mubr.f32.gmra.mrb[0].mxu0 %v118
    %v192 = vpop.f32.mrb[0].mxu0
    %v193 = vadd.f32 0.0, %v192
    %v194 = vpop.f32.mrb[0].mxu0
    %195 = vdwg.mxu0
    %196 = vmatprep.subr.mxu0 0.0
    %197 = vmatpush1.msra.mxu0 %v20
    %198 = vmatprep.subr.mxu0 0.0
    %199 = vmatpush1.msra.mxu0 %v21
    %200 = vmatprep.subr.mxu0 0.0
    %201 = vmatpush1.msra.mxu0 %v22
    %202 = vmatprep.subr.mxu0 0.0
    %203 = vmatpush1.msra.mxu0 %v23
    %204 = vmatprep.subr.mxu0 0.0
    %205 = vmatpush1.msra.mxu0 %v24
    %206 = vmatprep.subr.mxu0 0.0
    %207 = vmatpush1.msra.mxu0 %v25
    %208 = vmatprep.subr.mxu0 0.0
    %209 = vmatpush1.msra.mxu0 %v26
    %210 = vmatprep.subr.mxu0 0.0
    %211 = vmatpush1.msra.mxu0 %v27
    %212 = vmatprep.subr.mxu0 0.0
    %213 = vmatpush1.msra.mxu0 %v28
    %214 = vmatprep.subr.mxu0 0.0
    %215 = vmatpush1.msra.mxu0 %v29
    %216 = vmatprep.subr.mxu0 0.0
    %217 = vmatpush1.msra.mxu0 %v30
    %218 = vmatprep.subr.mxu0 0.0
    %219 = vmatpush1.msra.mxu0 %v31
    %220 = vmatprep.subr.mxu0 0.0
    %221 = vmatpush1.msra.mxu0 %v32
    %222 = vmatprep.subr.mxu0 0.0
    %223 = vmatpush1.msra.mxu0 %v33
    %224 = vmatprep.subr.mxu0 0.0
    %225 = vmatpush1.msra.mxu0 %v34
    %226 = vmatprep.subr.mxu0 0.0
    %227 = vmatpush1.msra.mxu0 %v35
    %228 = vmatprep.subr.mxu0 0.0
    %229 = vmatpush1.msra.mxu0 0.0
    %230 = vmatprep.subr.mxu0 0.0
    %231 = vmatpush1.msra.mxu0 0.0
    %232 = vmatprep.subr.mxu0 0.0
    %233 = vmatpush1.msra.mxu0 0.0
    %234 = vmatprep.subr.mxu0 0.0
    %235 = vmatpush1.msra.mxu0 0.0
    %236 = vmatprep.subr.mxu0 0.0
    %237 = vmatpush1.msra.mxu0 0.0
    %238 = vmatprep.subr.mxu0 0.0
    %239 = vmatpush1.msra.mxu0 0.0
    %240 = vmatprep.subr.mxu0 0.0
    %241 = vmatpush1.msra.mxu0 0.0
    %242 = vmatprep.subr.mxu0 0.0
    %243 = vmatpush1.msra.mxu0 0.0
    %244 = vmatprep.subr.mxu0 0.0
    %245 = vmatpush1.msra.mxu0 0.0
    %246 = vmatprep.subr.mxu0 0.0
    %247 = vmatpush1.msra.mxu0 0.0
    %248 = vmatprep.subr.mxu0 0.0
    %249 = vmatpush1.msra.mxu0 0.0
    %250 = vmatprep.subr.mxu0 0.0
    %251 = vmatpush1.msra.mxu0 0.0
    %252 = vmatprep.subr.mxu0 0.0
    %253 = vmatpush1.msra.mxu0 0.0
    %254 = vmatprep.subr.mxu0 0.0
    %255 = vmatpush1.msra.mxu0 0.0
    %256 = vmatprep.subr.mxu0 0.0
    %257 = vmatpush1.msra.mxu0 0.0
    %258 = vmatprep.subr.mxu0 0.0
    %259 = vmatpush1.msra.mxu0 0.0
    %260 = vmatprep.mubr.f32.mxu0 0.0
    %261 = vmatmul.mubr.f32.gmra.mrb[0].mxu0 %v18
    %v262 = vpop.f32.mrb[0].mxu0
    %v263 = vadd.f32 %v188, %v262
    %v264 = vpop.f32.mrb[0].mxu0
    %265 = vmatprep.mubr.f32.mxu0 0.0
    %266 = vmatmul.mubr.f32.gmra.mrb[0].mxu0 %v19
    %v267 = vpop.f32.mrb[0].mxu0
    %v268 = vadd.f32 %v193, %v267
    %v269 = vpop.f32.mrb[0].mxu0
    %270 = vdwg.mxu0
    %v271 = vld [vmem:[%s1 + $0x1] sm:$0x1]
    %v272 = vld [vmem:[%s1 + $0x9] sm:$0x1]
    %v273 = vld [vmem:[%s1 + $0x11] sm:$0x1]
    %v274 = vld [vmem:[%s1 + $0x19] sm:$0x1]
    %v275 = vld [vmem:[%s1 + $0x21] sm:$0x1]
    %v276 = vld [vmem:[%s1 + $0x29] sm:$0x1]
    %v277 = vld [vmem:[%s1 + $0x31] sm:$0x1]
    %v278 = vld [vmem:[%s1 + $0x39] sm:$0x1]
    %v279 = vld [vmem:[%s1 + $0x41] sm:$0x1]
    %v280 = vld [vmem:[%s1 + $0x49] sm:$0x1]
    %v281 = vld [vmem:[%s1 + $0x51] sm:$0x1]
    %v282 = vld [vmem:[%s1 + $0x59] sm:$0x1]
    %v283 = vld [vmem:[%s1 + $0x61] sm:$0x1]
    %v284 = vld [vmem:[%s1 + $0x69] sm:$0x1]
    %v285 = vld [vmem:[%s1 + $0x71] sm:$0x1]
    %v286 = vld [vmem:[%s1 + $0x79] sm:$0x1]
    %s287 = scalar_lea.vmem %s3, 128
    %v288 = vld [vmem:[%s287] sm:$0xff]
    %v289 = vld [vmem:[%s287 + $0x8] sm:$0xff]
    %v290 = vld [vmem:[%s287 + $0x10] sm:$0xff]
    %v291 = vld [vmem:[%s287 + $0x18] sm:$0xff]
    %v292 = vld [vmem:[%s287 + $0x20] sm:$0xff]
    %v293 = vld [vmem:[%s287 + $0x28] sm:$0xff]
    %v294 = vld [vmem:[%s287 + $0x30] sm:$0xff]
    %v295 = vld [vmem:[%s287 + $0x38] sm:$0xff]
    %v296 = vld [vmem:[%s287 + $0x40] sm:$0xff]
    %v297 = vld [vmem:[%s287 + $0x48] sm:$0xff]
    %v298 = vld [vmem:[%s287 + $0x50] sm:$0xff]
    %v299 = vld [vmem:[%s287 + $0x58] sm:$0xff]
    %v300 = vld [vmem:[%s287 + $0x60] sm:$0xff]
    %v301 = vld [vmem:[%s287 + $0x68] sm:$0xff]
    %v302 = vld [vmem:[%s287 + $0x70] sm:$0xff]
    %v303 = vld [vmem:[%s287 + $0x78] sm:$0xff]
    %v320 = vrot.slane %v272, 7
    %v321 = vsel %vm85, %v320, %v271
    %v322 = vrot.slane %v273, 6
    %v323 = vsel %vm88, %v322, %v321
    %v324 = vrot.slane %v274, 5
    %v325 = vsel %vm91, %v324, %v323
    %v326 = vrot.slane %v275, 4
    %v327 = vsel %vm94, %v326, %v325
    %v328 = vrot.slane %v276, 3
    %v329 = vsel %vm97, %v328, %v327
    %v330 = vrot.slane %v277, 2
    %v331 = vsel %vm100, %v330, %v329
    %v332 = vrot.slane %v278, 1
    %v333 = vsel %vm103, %v332, %v331
    %v334 = vrot.slane %v280, 7
    %v335 = vsel %vm85, %v334, %v279
    %v336 = vrot.slane %v281, 6
    %v337 = vsel %vm88, %v336, %v335
    %v338 = vrot.slane %v282, 5
    %v339 = vsel %vm91, %v338, %v337
    %v340 = vrot.slane %v283, 4
    %v341 = vsel %vm94, %v340, %v339
    %v342 = vrot.slane %v284, 3
    %v343 = vsel %vm97, %v342, %v341
    %v344 = vrot.slane %v285, 2
    %v345 = vsel %vm100, %v344, %v343
    %v346 = vrot.slane %v286, 1
    %v347 = vsel %vm103, %v346, %v345
    %350 = vmatprep.subr.mxu0 0.0
    %351 = vmatpush1.msra.mxu0 %v288
    %352 = vmatprep.subr.mxu0 0.0
    %353 = vmatpush1.msra.mxu0 %v289
    %354 = vmatprep.subr.mxu0 0.0
    %355 = vmatpush1.msra.mxu0 %v290
    %356 = vmatprep.subr.mxu0 0.0
    %357 = vmatpush1.msra.mxu0 %v291
    %358 = vmatprep.subr.mxu0 0.0
    %359 = vmatpush1.msra.mxu0 %v292
    %360 = vmatprep.subr.mxu0 0.0
    %361 = vmatpush1.msra.mxu0 %v293
    %362 = vmatprep.subr.mxu0 0.0
    %363 = vmatpush1.msra.mxu0 %v294
    %364 = vmatprep.subr.mxu0 0.0
    %365 = vmatpush1.msra.mxu0 %v295
    %366 = vmatprep.subr.mxu0 0.0
    %367 = vmatpush1.msra.mxu0 %v296
    %368 = vmatprep.subr.mxu0 0.0
    %369 = vmatpush1.msra.mxu0 %v297
    %370 = vmatprep.subr.mxu0 0.0
    %371 = vmatpush1.msra.mxu0 %v298
    %372 = vmatprep.subr.mxu0 0.0
    %373 = vmatpush1.msra.mxu0 %v299
    %374 = vmatprep.subr.mxu0 0.0
    %375 = vmatpush1.msra.mxu0 %v300
    %376 = vmatprep.subr.mxu0 0.0
    %377 = vmatpush1.msra.mxu0 %v301
    %378 = vmatprep.subr.mxu0 0.0
    %379 = vmatpush1.msra.mxu0 %v302
    %380 = vmatprep.subr.mxu0 0.0
    %381 = vmatpush1.msra.mxu0 %v303
    %382 = vmatprep.subr.mxu0 0.0
    %383 = vmatpush1.msra.mxu0 0.0
    %384 = vmatprep.subr.mxu0 0.0
    %385 = vmatpush1.msra.mxu0 0.0
    %386 = vmatprep.subr.mxu0 0.0
    %387 = vmatpush1.msra.mxu0 0.0
    %388 = vmatprep.subr.mxu0 0.0
    %389 = vmatpush1.msra.mxu0 0.0
    %390 = vmatprep.subr.mxu0 0.0
    %391 = vmatpush1.msra.mxu0 0.0
    %392 = vmatprep.subr.mxu0 0.0
    %393 = vmatpush1.msra.mxu0 0.0
    %394 = vmatprep.subr.mxu0 0.0
    %395 = vmatpush1.msra.mxu0 0.0
    %396 = vmatprep.subr.mxu0 0.0
    %397 = vmatpush1.msra.mxu0 0.0
    %398 = vmatprep.subr.mxu0 0.0
    %399 = vmatpush1.msra.mxu0 0.0
    %400 = vmatprep.subr.mxu0 0.0
    %401 = vmatpush1.msra.mxu0 0.0
    %402 = vmatprep.subr.mxu0 0.0
    %403 = vmatpush1.msra.mxu0 0.0
    %404 = vmatprep.subr.mxu0 0.0
    %405 = vmatpush1.msra.mxu0 0.0
    %406 = vmatprep.subr.mxu0 0.0
    %407 = vmatpush1.msra.mxu0 0.0
    %408 = vmatprep.subr.mxu0 0.0
    %409 = vmatpush1.msra.mxu0 0.0
    %410 = vmatprep.subr.mxu0 0.0
    %411 = vmatpush1.msra.mxu0 0.0
    %412 = vmatprep.subr.mxu0 0.0
    %413 = vmatpush1.msra.mxu0 0.0
    %414 = vmatprep.mubr.f32.mxu0 0.0
    %415 = vmatmul.mubr.f32.gmra.mrb[0].mxu0 %v333
    %v416 = vpop.f32.mrb[0].mxu0
    %v417 = vadd.f32 0.0, %v416
    %v418 = vpop.f32.mrb[0].mxu0
    %419 = vmatprep.mubr.f32.mxu0 0.0
    %420 = vmatmul.mubr.f32.gmra.mrb[0].mxu0 %v347
    %v421 = vpop.f32.mrb[0].mxu0
    %v422 = vadd.f32 0.0, %v421
    %v423 = vpop.f32.mrb[0].mxu0
    %424 = vdwg.mxu0
    %v425 = vadd.f32 %v263, %v417
    %v426 = vadd.f32 %v268, %v422
    %v427 = vld [vmem:[%s1 + $0x2] sm:$0x1]
    %v428 = vld [vmem:[%s1 + $0xa] sm:$0x1]
    %v429 = vld [vmem:[%s1 + $0x12] sm:$0x1]
    %v430 = vld [vmem:[%s1 + $0x1a] sm:$0x1]
    %v431 = vld [vmem:[%s1 + $0x22] sm:$0x1]
    %v432 = vld [vmem:[%s1 + $0x2a] sm:$0x1]
    %v433 = vld [vmem:[%s1 + $0x32] sm:$0x1]
    %v434 = vld [vmem:[%s1 + $0x3a] sm:$0x1]
    %v435 = vld [vmem:[%s1 + $0x42] sm:$0x1]
    %v436 = vld [vmem:[%s1 + $0x4a] sm:$0x1]
    %v437 = vld [vmem:[%s1 + $0x52] sm:$0x1]
    %v438 = vld [vmem:[%s1 + $0x5a] sm:$0x1]
    %v439 = vld [vmem:[%s1 + $0x62] sm:$0x1]
    %v440 = vld [vmem:[%s1 + $0x6a] sm:$0x1]
    %v441 = vld [vmem:[%s1 + $0x72] sm:$0x1]
    %v442 = vld [vmem:[%s1 + $0x7a] sm:$0x1]
    %s443 = scalar_lea.vmem %s3, 256
    %v444 = vld [vmem:[%s443] sm:$0xff]
    %v445 = vld [vmem:[%s443 + $0x8] sm:$0xff]
    %v446 = vld [vmem:[%s443 + $0x10] sm:$0xff]
    %v447 = vld [vmem:[%s443 + $0x18] sm:$0xff]
    %v448 = vld [vmem:[%s443 + $0x20] sm:$0xff]
    %v449 = vld [vmem:[%s443 + $0x28] sm:$0xff]
    %v450 = vld [vmem:[%s443 + $0x30] sm:$0xff]
    %v451 = vld [vmem:[%s443 + $0x38] sm:$0xff]
    %v452 = vld [vmem:[%s443 + $0x40] sm:$0xff]
    %v453 = vld [vmem:[%s443 + $0x48] sm:$0xff]
    %v454 = vld [vmem:[%s443 + $0x50] sm:$0xff]
    %v455 = vld [vmem:[%s443 + $0x58] sm:$0xff]
    %v456 = vld [vmem:[%s443 + $0x60] sm:$0xff]
    %v457 = vld [vmem:[%s443 + $0x68] sm:$0xff]
    %v458 = vld [vmem:[%s443 + $0x70] sm:$0xff]
    %v459 = vld [vmem:[%s443 + $0x78] sm:$0xff]
    %v476 = vrot.slane %v428, 7
    %v477 = vsel %vm85, %v476, %v427
    %v478 = vrot.slane %v429, 6
    %v479 = vsel %vm88, %v478, %v477
    %v480 = vrot.slane %v430, 5
    %v481 = vsel %vm91, %v480, %v479
    %v482 = vrot.slane %v431, 4
    %v483 = vsel %vm94, %v482, %v481
    %v484 = vrot.slane %v432, 3
    %v485 = vsel %vm97, %v484, %v483
    %v486 = vrot.slane %v433, 2
    %v487 = vsel %vm100, %v486, %v485
    %v488 = vrot.slane %v434, 1
    %v489 = vsel %vm103, %v488, %v487
    %v490 = vrot.slane %v436, 7
    %v491 = vsel %vm85, %v490, %v435
    %v492 = vrot.slane %v437, 6
    %v493 = vsel %vm88, %v492, %v491
    %v494 = vrot.slane %v438, 5
    %v495 = vsel %vm91, %v494, %v493
    %v496 = vrot.slane %v439, 4
    %v497 = vsel %vm94, %v496, %v495
    %v498 = vrot.slane %v440, 3
    %v499 = vsel %vm97, %v498, %v497
    %v500 = vrot.slane %v441, 2
    %v501 = vsel %vm100, %v500, %v499
    %v502 = vrot.slane %v442, 1
    %v503 = vsel %vm103, %v502, %v501
    %506 = vmatprep.subr.mxu0 0.0
    %507 = vmatpush1.msra.mxu0 %v444
    %508 = vmatprep.subr.mxu0 0.0
    %509 = vmatpush1.msra.mxu0 %v445
    %510 = vmatprep.subr.mxu0 0.0
    %511 = vmatpush1.msra.mxu0 %v446
    %512 = vmatprep.subr.mxu0 0.0
    %513 = vmatpush1.msra.mxu0 %v447
    %514 = vmatprep.subr.mxu0 0.0
    %515 = vmatpush1.msra.mxu0 %v448
    %516 = vmatprep.subr.mxu0 0.0
    %517 = vmatpush1.msra.mxu0 %v449
    %518 = vmatprep.subr.mxu0 0.0
    %519 = vmatpush1.msra.mxu0 %v450
    %520 = vmatprep.subr.mxu0 0.0
    %521 = vmatpush1.msra.mxu0 %v451
    %522 = vmatprep.subr.mxu0 0.0
    %523 = vmatpush1.msra.mxu0 %v452
    %524 = vmatprep.subr.mxu0 0.0
    %525 = vmatpush1.msra.mxu0 %v453
    %526 = vmatprep.subr.mxu0 0.0
    %527 = vmatpush1.msra.mxu0 %v454
    %528 = vmatprep.subr.mxu0 0.0
    %529 = vmatpush1.msra.mxu0 %v455
    %530 = vmatprep.subr.mxu0 0.0
    %531 = vmatpush1.msra.mxu0 %v456
    %532 = vmatprep.subr.mxu0 0.0
    %533 = vmatpush1.msra.mxu0 %v457
    %534 = vmatprep.subr.mxu0 0.0
    %535 = vmatpush1.msra.mxu0 %v458
    %536 = vmatprep.subr.mxu0 0.0
    %537 = vmatpush1.msra.mxu0 %v459
    %538 = vmatprep.subr.mxu0 0.0
    %539 = vmatpush1.msra.mxu0 0.0
    %540 = vmatprep.subr.mxu0 0.0
    %541 = vmatpush1.msra.mxu0 0.0
    %542 = vmatprep.subr.mxu0 0.0
    %543 = vmatpush1.msra.mxu0 0.0
    %544 = vmatprep.subr.mxu0 0.0
    %545 = vmatpush1.msra.mxu0 0.0
    %546 = vmatprep.subr.mxu0 0.0
    %547 = vmatpush1.msra.mxu0 0.0
    %548 = vmatprep.subr.mxu0 0.0
    %549 = vmatpush1.msra.mxu0 0.0
    %550 = vmatprep.subr.mxu0 0.0
    %551 = vmatpush1.msra.mxu0 0.0
    %552 = vmatprep.subr.mxu0 0.0
    %553 = vmatpush1.msra.mxu0 0.0
    %554 = vmatprep.subr.mxu0 0.0
    %555 = vmatpush1.msra.mxu0 0.0
    %556 = vmatprep.subr.mxu0 0.0
    %557 = vmatpush1.msra.mxu0 0.0
    %558 = vmatprep.subr.mxu0 0.0
    %559 = vmatpush1.msra.mxu0 0.0
    %560 = vmatprep.subr.mxu0 0.0
    %561 = vmatpush1.msra.mxu0 0.0
    %562 = vmatprep.subr.mxu0 0.0
    %563 = vmatpush1.msra.mxu0 0.0
    %564 = vmatprep.subr.mxu0 0.0
    %565 = vmatpush1.msra.mxu0 0.0
    %566 = vmatprep.subr.mxu0 0.0
    %567 = vmatpush1.msra.mxu0 0.0
    %568 = vmatprep.subr.mxu0 0.0
    %569 = vmatpush1.msra.mxu0 0.0
    %570 = vmatprep.mubr.f32.mxu0 0.0
    %571 = vmatmul.mubr.f32.gmra.mrb[0].mxu0 %v489
    %v572 = vpop.f32.mrb[0].mxu0
    %v573 = vadd.f32 0.0, %v572
    %v574 = vpop.f32.mrb[0].mxu0
    %575 = vmatprep.mubr.f32.mxu0 0.0
    %576 = vmatmul.mubr.f32.gmra.mrb[0].mxu0 %v503
    %v577 = vpop.f32.mrb[0].mxu0
    %v578 = vadd.f32 0.0, %v577
    %v579 = vpop.f32.mrb[0].mxu0
    %580 = vdwg.mxu0
    %v581 = vadd.f32 %v425, %v573
    %v582 = vadd.f32 %v426, %v578
    %v583 = vld [vmem:[%s1 + $0x3] sm:$0x1]
    %v584 = vld [vmem:[%s1 + $0xb] sm:$0x1]
    %v585 = vld [vmem:[%s1 + $0x13] sm:$0x1]
    %v586 = vld [vmem:[%s1 + $0x1b] sm:$0x1]
    %v587 = vld [vmem:[%s1 + $0x23] sm:$0x1]
    %v588 = vld [vmem:[%s1 + $0x2b] sm:$0x1]
    %v589 = vld [vmem:[%s1 + $0x33] sm:$0x1]
    %v590 = vld [vmem:[%s1 + $0x3b] sm:$0x1]
    %v591 = vld [vmem:[%s1 + $0x43] sm:$0x1]
    %v592 = vld [vmem:[%s1 + $0x4b] sm:$0x1]
    %v593 = vld [vmem:[%s1 + $0x53] sm:$0x1]
    %v594 = vld [vmem:[%s1 + $0x5b] sm:$0x1]
    %v595 = vld [vmem:[%s1 + $0x63] sm:$0x1]
    %v596 = vld [vmem:[%s1 + $0x6b] sm:$0x1]
    %v597 = vld [vmem:[%s1 + $0x73] sm:$0x1]
    %v598 = vld [vmem:[%s1 + $0x7b] sm:$0x1]
    %s599 = scalar_lea.vmem %s3, 384
    %v600 = vld [vmem:[%s599] sm:$0xff]
    %v601 = vld [vmem:[%s599 + $0x8] sm:$0xff]
    %v602 = vld [vmem:[%s599 + $0x10] sm:$0xff]
    %v603 = vld [vmem:[%s599 + $0x18] sm:$0xff]
    %v604 = vld [vmem:[%s599 + $0x20] sm:$0xff]
    %v605 = vld [vmem:[%s599 + $0x28] sm:$0xff]
    %v606 = vld [vmem:[%s599 + $0x30] sm:$0xff]
    %v607 = vld [vmem:[%s599 + $0x38] sm:$0xff]
    %v608 = vld [vmem:[%s599 + $0x40] sm:$0xff]
    %v609 = vld [vmem:[%s599 + $0x48] sm:$0xff]
    %v610 = vld [vmem:[%s599 + $0x50] sm:$0xff]
    %v611 = vld [vmem:[%s599 + $0x58] sm:$0xff]
    %v612 = vld [vmem:[%s599 + $0x60] sm:$0xff]
    %v613 = vld [vmem:[%s599 + $0x68] sm:$0xff]
    %v614 = vld [vmem:[%s599 + $0x70] sm:$0xff]
    %v615 = vld [vmem:[%s599 + $0x78] sm:$0xff]
    %v632 = vrot.slane %v584, 7
    %v633 = vsel %vm85, %v632, %v583
    %v634 = vrot.slane %v585, 6
    %v635 = vsel %vm88, %v634, %v633
    %v636 = vrot.slane %v586, 5
    %v637 = vsel %vm91, %v636, %v635
    %v638 = vrot.slane %v587, 4
    %v639 = vsel %vm94, %v638, %v637
    %v640 = vrot.slane %v588, 3
    %v641 = vsel %vm97, %v640, %v639
    %v642 = vrot.slane %v589, 2
    %v643 = vsel %vm100, %v642, %v641
    %v644 = vrot.slane %v590, 1
    %v645 = vsel %vm103, %v644, %v643
    %v646 = vrot.slane %v592, 7
    %v647 = vsel %vm85, %v646, %v591
    %v648 = vrot.slane %v593, 6
    %v649 = vsel %vm88, %v648, %v647
    %v650 = vrot.slane %v594, 5
    %v651 = vsel %vm91, %v650, %v649
    %v652 = vrot.slane %v595, 4
    %v653 = vsel %vm94, %v652, %v651
    %v654 = vrot.slane %v596, 3
    %v655 = vsel %vm97, %v654, %v653
    %v656 = vrot.slane %v597, 2
    %v657 = vsel %vm100, %v656, %v655
    %v658 = vrot.slane %v598, 1
    %v659 = vsel %vm103, %v658, %v657
    %662 = vmatprep.subr.mxu0 0.0
    %663 = vmatpush1.msra.mxu0 %v600
    %664 = vmatprep.subr.mxu0 0.0
    %665 = vmatpush1.msra.mxu0 %v601
    %666 = vmatprep.subr.mxu0 0.0
    %667 = vmatpush1.msra.mxu0 %v602
    %668 = vmatprep.subr.mxu0 0.0
    %669 = vmatpush1.msra.mxu0 %v603
    %670 = vmatprep.subr.mxu0 0.0
    %671 = vmatpush1.msra.mxu0 %v604
    %672 = vmatprep.subr.mxu0 0.0
    %673 = vmatpush1.msra.mxu0 %v605
    %674 = vmatprep.subr.mxu0 0.0
    %675 = vmatpush1.msra.mxu0 %v606
    %676 = vmatprep.subr.mxu0 0.0
    %677 = vmatpush1.msra.mxu0 %v607
    %678 = vmatprep.subr.mxu0 0.0
    %679 = vmatpush1.msra.mxu0 %v608
    %680 = vmatprep.subr.mxu0 0.0
    %681 = vmatpush1.msra.mxu0 %v609
    %682 = vmatprep.subr.mxu0 0.0
    %683 = vmatpush1.msra.mxu0 %v610
    %684 = vmatprep.subr.mxu0 0.0
    %685 = vmatpush1.msra.mxu0 %v611
    %686 = vmatprep.subr.mxu0 0.0
    %687 = vmatpush1.msra.mxu0 %v612
    %688 = vmatprep.subr.mxu0 0.0
    %689 = vmatpush1.msra.mxu0 %v613
    %690 = vmatprep.subr.mxu0 0.0
    %691 = vmatpush1.msra.mxu0 %v614
    %692 = vmatprep.subr.mxu0 0.0
    %693 = vmatpush1.msra.mxu0 %v615
    %694 = vmatprep.subr.mxu0 0.0
    %695 = vmatpush1.msra.mxu0 0.0
    %696 = vmatprep.subr.mxu0 0.0
    %697 = vmatpush1.msra.mxu0 0.0
    %698 = vmatprep.subr.mxu0 0.0
    %699 = vmatpush1.msra.mxu0 0.0
    %700 = vmatprep.subr.mxu0 0.0
    %701 = vmatpush1.msra.mxu0 0.0
    %702 = vmatprep.subr.mxu0 0.0
    %703 = vmatpush1.msra.mxu0 0.0
    %704 = vmatprep.subr.mxu0 0.0
    %705 = vmatpush1.msra.mxu0 0.0
    %706 = vmatprep.subr.mxu0 0.0
    %707 = vmatpush1.msra.mxu0 0.0
    %708 = vmatprep.subr.mxu0 0.0
    %709 = vmatpush1.msra.mxu0 0.0
    %710 = vmatprep.subr.mxu0 0.0
    %711 = vmatpush1.msra.mxu0 0.0
    %712 = vmatprep.subr.mxu0 0.0
    %713 = vmatpush1.msra.mxu0 0.0
    %714 = vmatprep.subr.mxu0 0.0
    %715 = vmatpush1.msra.mxu0 0.0
    %716 = vmatprep.subr.mxu0 0.0
    %717 = vmatpush1.msra.mxu0 0.0
    %718 = vmatprep.subr.mxu0 0.0
    %719 = vmatpush1.msra.mxu0 0.0
    %720 = vmatprep.subr.mxu0 0.0
    %721 = vmatpush1.msra.mxu0 0.0
    %722 = vmatprep.subr.mxu0 0.0
    %723 = vmatpush1.msra.mxu0 0.0
    %724 = vmatprep.subr.mxu0 0.0
    %725 = vmatpush1.msra.mxu0 0.0
    %726 = vmatprep.mubr.f32.mxu0 0.0
    %727 = vmatmul.mubr.f32.gmra.mrb[0].mxu0 %v645
    %v728 = vpop.f32.mrb[0].mxu0
    %v729 = vadd.f32 0.0, %v728
    %v730 = vpop.f32.mrb[0].mxu0
    %731 = vmatprep.mubr.f32.mxu0 0.0
    %732 = vmatmul.mubr.f32.gmra.mrb[0].mxu0 %v659
    %v733 = vpop.f32.mrb[0].mxu0
    %v734 = vadd.f32 0.0, %v733
    %v735 = vpop.f32.mrb[0].mxu0
    %736 = vdwg.mxu0
    %v737 = vadd.f32 %v581, %v729
    %v738 = vadd.f32 %v582, %v734
    %v739 = vld [vmem:[%s1 + $0x4] sm:$0x1]
    %v740 = vld [vmem:[%s1 + $0xc] sm:$0x1]
    %v741 = vld [vmem:[%s1 + $0x14] sm:$0x1]
    %v742 = vld [vmem:[%s1 + $0x1c] sm:$0x1]
    %v743 = vld [vmem:[%s1 + $0x24] sm:$0x1]
    %v744 = vld [vmem:[%s1 + $0x2c] sm:$0x1]
    %v745 = vld [vmem:[%s1 + $0x34] sm:$0x1]
    %v746 = vld [vmem:[%s1 + $0x3c] sm:$0x1]
    %v747 = vld [vmem:[%s1 + $0x44] sm:$0x1]
    %v748 = vld [vmem:[%s1 + $0x4c] sm:$0x1]
    %v749 = vld [vmem:[%s1 + $0x54] sm:$0x1]
    %v750 = vld [vmem:[%s1 + $0x5c] sm:$0x1]
    %v751 = vld [vmem:[%s1 + $0x64] sm:$0x1]
    %v752 = vld [vmem:[%s1 + $0x6c] sm:$0x1]
    %v753 = vld [vmem:[%s1 + $0x74] sm:$0x1]
    %v754 = vld [vmem:[%s1 + $0x7c] sm:$0x1]
    %s755 = scalar_lea.vmem %s3, 512
    %v756 = vld [vmem:[%s755] sm:$0xff]
    %v757 = vld [vmem:[%s755 + $0x8] sm:$0xff]
    %v758 = vld [vmem:[%s755 + $0x10] sm:$0xff]
    %v759 = vld [vmem:[%s755 + $0x18] sm:$0xff]
    %v760 = vld [vmem:[%s755 + $0x20] sm:$0xff]
    %v761 = vld [vmem:[%s755 + $0x28] sm:$0xff]
    %v762 = vld [vmem:[%s755 + $0x30] sm:$0xff]
    %v763 = vld [vmem:[%s755 + $0x38] sm:$0xff]
    %v764 = vld [vmem:[%s755 + $0x40] sm:$0xff]
    %v765 = vld [vmem:[%s755 + $0x48] sm:$0xff]
    %v766 = vld [vmem:[%s755 + $0x50] sm:$0xff]
    %v767 = vld [vmem:[%s755 + $0x58] sm:$0xff]
    %v768 = vld [vmem:[%s755 + $0x60] sm:$0xff]
    %v769 = vld [vmem:[%s755 + $0x68] sm:$0xff]
    %v770 = vld [vmem:[%s755 + $0x70] sm:$0xff]
    %v771 = vld [vmem:[%s755 + $0x78] sm:$0xff]
    %v788 = vrot.slane %v740, 7
    %v789 = vsel %vm85, %v788, %v739
    %v790 = vrot.slane %v741, 6
    %v791 = vsel %vm88, %v790, %v789
    %v792 = vrot.slane %v742, 5
    %v793 = vsel %vm91, %v792, %v791
    %v794 = vrot.slane %v743, 4
    %v795 = vsel %vm94, %v794, %v793
    %v796 = vrot.slane %v744, 3
    %v797 = vsel %vm97, %v796, %v795
    %v798 = vrot.slane %v745, 2
    %v799 = vsel %vm100, %v798, %v797
    %v800 = vrot.slane %v746, 1
    %v801 = vsel %vm103, %v800, %v799
    %v802 = vrot.slane %v748, 7
    %v803 = vsel %vm85, %v802, %v747
    %v804 = vrot.slane %v749, 6
    %v805 = vsel %vm88, %v804, %v803
    %v806 = vrot.slane %v750, 5
    %v807 = vsel %vm91, %v806, %v805
    %v808 = vrot.slane %v751, 4
    %v809 = vsel %vm94, %v808, %v807
    %v810 = vrot.slane %v752, 3
    %v811 = vsel %vm97, %v810, %v809
    %v812 = vrot.slane %v753, 2
    %v813 = vsel %vm100, %v812, %v811
    %v814 = vrot.slane %v754, 1
    %v815 = vsel %vm103, %v814, %v813
    %818 = vmatprep.subr.mxu0 0.0
    %819 = vmatpush1.msra.mxu0 %v756
    %820 = vmatprep.subr.mxu0 0.0
    %821 = vmatpush1.msra.mxu0 %v757
    %822 = vmatprep.subr.mxu0 0.0
    %823 = vmatpush1.msra.mxu0 %v758
    %824 = vmatprep.subr.mxu0 0.0
    %825 = vmatpush1.msra.mxu0 %v759
    %826 = vmatprep.subr.mxu0 0.0
    %827 = vmatpush1.msra.mxu0 %v760
    %828 = vmatprep.subr.mxu0 0.0
    %829 = vmatpush1.msra.mxu0 %v761
    %830 = vmatprep.subr.mxu0 0.0
    %831 = vmatpush1.msra.mxu0 %v762
    %832 = vmatprep.subr.mxu0 0.0
    %833 = vmatpush1.msra.mxu0 %v763
    %834 = vmatprep.subr.mxu0 0.0
    %835 = vmatpush1.msra.mxu0 %v764
    %836 = vmatprep.subr.mxu0 0.0
    %837 = vmatpush1.msra.mxu0 %v765
    %838 = vmatprep.subr.mxu0 0.0
    %839 = vmatpush1.msra.mxu0 %v766
    %840 = vmatprep.subr.mxu0 0.0
    %841 = vmatpush1.msra.mxu0 %v767
    %842 = vmatprep.subr.mxu0 0.0
    %843 = vmatpush1.msra.mxu0 %v768
    %844 = vmatprep.subr.mxu0 0.0
    %845 = vmatpush1.msra.mxu0 %v769
    %846 = vmatprep.subr.mxu0 0.0
    %847 = vmatpush1.msra.mxu0 %v770
    %848 = vmatprep.subr.mxu0 0.0
    %849 = vmatpush1.msra.mxu0 %v771
    %850 = vmatprep.subr.mxu0 0.0
    %851 = vmatpush1.msra.mxu0 0.0
    %852 = vmatprep.subr.mxu0 0.0
    %853 = vmatpush1.msra.mxu0 0.0
    %854 = vmatprep.subr.mxu0 0.0
    %855 = vmatpush1.msra.mxu0 0.0
    %856 = vmatprep.subr.mxu0 0.0
    %857 = vmatpush1.msra.mxu0 0.0
    %858 = vmatprep.subr.mxu0 0.0
    %859 = vmatpush1.msra.mxu0 0.0
    %860 = vmatprep.subr.mxu0 0.0
    %861 = vmatpush1.msra.mxu0 0.0
    %862 = vmatprep.subr.mxu0 0.0
    %863 = vmatpush1.msra.mxu0 0.0
    %864 = vmatprep.subr.mxu0 0.0
    %865 = vmatpush1.msra.mxu0 0.0
    %866 = vmatprep.subr.mxu0 0.0
    %867 = vmatpush1.msra.mxu0 0.0
    %868 = vmatprep.subr.mxu0 0.0
    %869 = vmatpush1.msra.mxu0 0.0
    %870 = vmatprep.subr.mxu0 0.0
    %871 = vmatpush1.msra.mxu0 0.0
    %872 = vmatprep.subr.mxu0 0.0
    %873 = vmatpush1.msra.mxu0 0.0
    %874 = vmatprep.subr.mxu0 0.0
    %875 = vmatpush1.msra.mxu0 0.0
    %876 = vmatprep.subr.mxu0 0.0
    %877 = vmatpush1.msra.mxu0 0.0
    %878 = vmatprep.subr.mxu0 0.0
    %879 = vmatpush1.msra.mxu0 0.0
    %880 = vmatprep.subr.mxu0 0.0
    %881 = vmatpush1.msra.mxu0 0.0
    %882 = vmatprep.mubr.f32.mxu0 0.0
    %883 = vmatmul.mubr.f32.gmra.mrb[0].mxu0 %v801
    %v884 = vpop.f32.mrb[0].mxu0
    %v885 = vadd.f32 0.0, %v884
    %v886 = vpop.f32.mrb[0].mxu0
    %887 = vmatprep.mubr.f32.mxu0 0.0
    %888 = vmatmul.mubr.f32.gmra.mrb[0].mxu0 %v815
    %v889 = vpop.f32.mrb[0].mxu0
    %v890 = vadd.f32 0.0, %v889
    %v891 = vpop.f32.mrb[0].mxu0
    %892 = vdwg.mxu0
    %v893 = vadd.f32 %v737, %v885
    %v894 = vadd.f32 %v738, %v890
    %v895 = vld [vmem:[%s1 + $0x5] sm:$0x1]
    %v896 = vld [vmem:[%s1 + $0xd] sm:$0x1]
    %v897 = vld [vmem:[%s1 + $0x15] sm:$0x1]
    %v898 = vld [vmem:[%s1 + $0x1d] sm:$0x1]
    %v899 = vld [vmem:[%s1 + $0x25] sm:$0x1]
    %v900 = vld [vmem:[%s1 + $0x2d] sm:$0x1]
    %v901 = vld [vmem:[%s1 + $0x35] sm:$0x1]
    %v902 = vld [vmem:[%s1 + $0x3d] sm:$0x1]
    %v903 = vld [vmem:[%s1 + $0x45] sm:$0x1]
    %v904 = vld [vmem:[%s1 + $0x4d] sm:$0x1]
    %v905 = vld [vmem:[%s1 + $0x55] sm:$0x1]
    %v906 = vld [vmem:[%s1 + $0x5d] sm:$0x1]
    %v907 = vld [vmem:[%s1 + $0x65] sm:$0x1]
    %v908 = vld [vmem:[%s1 + $0x6d] sm:$0x1]
    %v909 = vld [vmem:[%s1 + $0x75] sm:$0x1]
    %v910 = vld [vmem:[%s1 + $0x7d] sm:$0x1]
    %s911 = scalar_lea.vmem %s3, 640
    %v912 = vld [vmem:[%s911] sm:$0xff]
    %v913 = vld [vmem:[%s911 + $0x8] sm:$0xff]
    %v914 = vld [vmem:[%s911 + $0x10] sm:$0xff]
    %v915 = vld [vmem:[%s911 + $0x18] sm:$0xff]
    %v916 = vld [vmem:[%s911 + $0x20] sm:$0xff]
    %v917 = vld [vmem:[%s911 + $0x28] sm:$0xff]
    %v918 = vld [vmem:[%s911 + $0x30] sm:$0xff]
    %v919 = vld [vmem:[%s911 + $0x38] sm:$0xff]
    %v920 = vld [vmem:[%s911 + $0x40] sm:$0xff]
    %v921 = vld [vmem:[%s911 + $0x48] sm:$0xff]
    %v922 = vld [vmem:[%s911 + $0x50] sm:$0xff]
    %v923 = vld [vmem:[%s911 + $0x58] sm:$0xff]
    %v924 = vld [vmem:[%s911 + $0x60] sm:$0xff]
    %v925 = vld [vmem:[%s911 + $0x68] sm:$0xff]
    %v926 = vld [vmem:[%s911 + $0x70] sm:$0xff]
    %v927 = vld [vmem:[%s911 + $0x78] sm:$0xff]
    %v944 = vrot.slane %v896, 7
    %v945 = vsel %vm85, %v944, %v895
    %v946 = vrot.slane %v897, 6
    %v947 = vsel %vm88, %v946, %v945
    %v948 = vrot.slane %v898, 5
    %v949 = vsel %vm91, %v948, %v947
    %v950 = vrot.slane %v899, 4
    %v951 = vsel %vm94, %v950, %v949
    %v952 = vrot.slane %v900, 3
    %v953 = vsel %vm97, %v952, %v951
    %v954 = vrot.slane %v901, 2
    %v955 = vsel %vm100, %v954, %v953
    %v956 = vrot.slane %v902, 1
    %v957 = vsel %vm103, %v956, %v955
    %v958 = vrot.slane %v904, 7
    %v959 = vsel %vm85, %v958, %v903
    %v960 = vrot.slane %v905, 6
    %v961 = vsel %vm88, %v960, %v959
    %v962 = vrot.slane %v906, 5
    %v963 = vsel %vm91, %v962, %v961
    %v964 = vrot.slane %v907, 4
    %v965 = vsel %vm94, %v964, %v963
    %v966 = vrot.slane %v908, 3
    %v967 = vsel %vm97, %v966, %v965
    %v968 = vrot.slane %v909, 2
    %v969 = vsel %vm100, %v968, %v967
    %v970 = vrot.slane %v910, 1
    %v971 = vsel %vm103, %v970, %v969
    %974 = vmatprep.subr.mxu0 0.0
    %975 = vmatpush1.msra.mxu0 %v912
    %976 = vmatprep.subr.mxu0 0.0
    %977 = vmatpush1.msra.mxu0 %v913
    %978 = vmatprep.subr.mxu0 0.0
    %979 = vmatpush1.msra.mxu0 %v914
    %980 = vmatprep.subr.mxu0 0.0
    %981 = vmatpush1.msra.mxu0 %v915
    %982 = vmatprep.subr.mxu0 0.0
    %983 = vmatpush1.msra.mxu0 %v916
    %984 = vmatprep.subr.mxu0 0.0
    %985 = vmatpush1.msra.mxu0 %v917
    %986 = vmatprep.subr.mxu0 0.0
    %987 = vmatpush1.msra.mxu0 %v918
    %988 = vmatprep.subr.mxu0 0.0
    %989 = vmatpush1.msra.mxu0 %v919
    %990 = vmatprep.subr.mxu0 0.0
    %991 = vmatpush1.msra.mxu0 %v920
    %992 = vmatprep.subr.mxu0 0.0
    %993 = vmatpush1.msra.mxu0 %v921
    %994 = vmatprep.subr.mxu0 0.0
    %995 = vmatpush1.msra.mxu0 %v922
    %996 = vmatprep.subr.mxu0 0.0
    %997 = vmatpush1.msra.mxu0 %v923
    %998 = vmatprep.subr.mxu0 0.0
    %999 = vmatpush1.msra.mxu0 %v924
    %1000 = vmatprep.subr.mxu0 0.0
    %1001 = vmatpush1.msra.mxu0 %v925
    %1002 = vmatprep.subr.mxu0 0.0
    %1003 = vmatpush1.msra.mxu0 %v926
    %1004 = vmatprep.subr.mxu0 0.0
    %1005 = vmatpush1.msra.mxu0 %v927
    %1006 = vmatprep.subr.mxu0 0.0
    %1007 = vmatpush1.msra.mxu0 0.0
    %1008 = vmatprep.subr.mxu0 0.0
    %1009 = vmatpush1.msra.mxu0 0.0
    %1010 = vmatprep.subr.mxu0 0.0
    %1011 = vmatpush1.msra.mxu0 0.0
    %1012 = vmatprep.subr.mxu0 0.0
    %1013 = vmatpush1.msra.mxu0 0.0
    %1014 = vmatprep.subr.mxu0 0.0
    %1015 = vmatpush1.msra.mxu0 0.0
    %1016 = vmatprep.subr.mxu0 0.0
    %1017 = vmatpush1.msra.mxu0 0.0
    %1018 = vmatprep.subr.mxu0 0.0
    %1019 = vmatpush1.msra.mxu0 0.0
    %1020 = vmatprep.subr.mxu0 0.0
    %1021 = vmatpush1.msra.mxu0 0.0
    %1022 = vmatprep.subr.mxu0 0.0
    %1023 = vmatpush1.msra.mxu0 0.0
    %1024 = vmatprep.subr.mxu0 0.0
    %1025 = vmatpush1.msra.mxu0 0.0
    %1026 = vmatprep.subr.mxu0 0.0
    %1027 = vmatpush1.msra.mxu0 0.0
    %1028 = vmatprep.subr.mxu0 0.0
    %1029 = vmatpush1.msra.mxu0 0.0
    %1030 = vmatprep.subr.mxu0 0.0
    %1031 = vmatpush1.msra.mxu0 0.0
    %1032 = vmatprep.subr.mxu0 0.0
    %1033 = vmatpush1.msra.mxu0 0.0
    %1034 = vmatprep.subr.mxu0 0.0
    %1035 = vmatpush1.msra.mxu0 0.0
    %1036 = vmatprep.subr.mxu0 0.0
    %1037 = vmatpush1.msra.mxu0 0.0
    %1038 = vmatprep.mubr.f32.mxu0 0.0
    %1039 = vmatmul.mubr.f32.gmra.mrb[0].mxu0 %v957
    %v1040 = vpop.f32.mrb[0].mxu0
    %v1041 = vadd.f32 0.0, %v1040
    %v1042 = vpop.f32.mrb[0].mxu0
    %1043 = vmatprep.mubr.f32.mxu0 0.0
    %1044 = vmatmul.mubr.f32.gmra.mrb[0].mxu0 %v971
    %v1045 = vpop.f32.mrb[0].mxu0
    %v1046 = vadd.f32 0.0, %v1045
    %v1047 = vpop.f32.mrb[0].mxu0
    %1048 = vdwg.mxu0
    %v1049 = vadd.f32 %v893, %v1041
    %v1050 = vadd.f32 %v894, %v1046
    %v1051 = vld [vmem:[%s1 + $0x6] sm:$0x1]
    %v1052 = vld [vmem:[%s1 + $0xe] sm:$0x1]
    %v1053 = vld [vmem:[%s1 + $0x16] sm:$0x1]
    %v1054 = vld [vmem:[%s1 + $0x1e] sm:$0x1]
    %v1055 = vld [vmem:[%s1 + $0x26] sm:$0x1]
    %v1056 = vld [vmem:[%s1 + $0x2e] sm:$0x1]
    %v1057 = vld [vmem:[%s1 + $0x36] sm:$0x1]
    %v1058 = vld [vmem:[%s1 + $0x3e] sm:$0x1]
    %v1059 = vld [vmem:[%s1 + $0x46] sm:$0x1]
    %v1060 = vld [vmem:[%s1 + $0x4e] sm:$0x1]
    %v1061 = vld [vmem:[%s1 + $0x56] sm:$0x1]
    %v1062 = vld [vmem:[%s1 + $0x5e] sm:$0x1]
    %v1063 = vld [vmem:[%s1 + $0x66] sm:$0x1]
    %v1064 = vld [vmem:[%s1 + $0x6e] sm:$0x1]
    %v1065 = vld [vmem:[%s1 + $0x76] sm:$0x1]
    %v1066 = vld [vmem:[%s1 + $0x7e] sm:$0x1]
    %s1067 = scalar_lea.vmem %s3, 768
    %v1068 = vld [vmem:[%s1067] sm:$0xff]
    %v1069 = vld [vmem:[%s1067 + $0x8] sm:$0xff]
    %v1070 = vld [vmem:[%s1067 + $0x10] sm:$0xff]
    %v1071 = vld [vmem:[%s1067 + $0x18] sm:$0xff]
    %v1072 = vld [vmem:[%s1067 + $0x20] sm:$0xff]
    %v1073 = vld [vmem:[%s1067 + $0x28] sm:$0xff]
    %v1074 = vld [vmem:[%s1067 + $0x30] sm:$0xff]
    %v1075 = vld [vmem:[%s1067 + $0x38] sm:$0xff]
    %v1076 = vld [vmem:[%s1067 + $0x40] sm:$0xff]
    %v1077 = vld [vmem:[%s1067 + $0x48] sm:$0xff]
    %v1078 = vld [vmem:[%s1067 + $0x50] sm:$0xff]
    %v1079 = vld [vmem:[%s1067 + $0x58] sm:$0xff]
    %v1080 = vld [vmem:[%s1067 + $0x60] sm:$0xff]
    %v1081 = vld [vmem:[%s1067 + $0x68] sm:$0xff]
    %v1082 = vld [vmem:[%s1067 + $0x70] sm:$0xff]
    %v1083 = vld [vmem:[%s1067 + $0x78] sm:$0xff]
    %v1100 = vrot.slane %v1052, 7
    %v1101 = vsel %vm85, %v1100, %v1051
    %v1102 = vrot.slane %v1053, 6
    %v1103 = vsel %vm88, %v1102, %v1101
    %v1104 = vrot.slane %v1054, 5
    %v1105 = vsel %vm91, %v1104, %v1103
    %v1106 = vrot.slane %v1055, 4
    %v1107 = vsel %vm94, %v1106, %v1105
    %v1108 = vrot.slane %v1056, 3
    %v1109 = vsel %vm97, %v1108, %v1107
    %v1110 = vrot.slane %v1057, 2
    %v1111 = vsel %vm100, %v1110, %v1109
    %v1112 = vrot.slane %v1058, 1
    %v1113 = vsel %vm103, %v1112, %v1111
    %v1114 = vrot.slane %v1060, 7
    %v1115 = vsel %vm85, %v1114, %v1059
    %v1116 = vrot.slane %v1061, 6
    %v1117 = vsel %vm88, %v1116, %v1115
    %v1118 = vrot.slane %v1062, 5
    %v1119 = vsel %vm91, %v1118, %v1117
    %v1120 = vrot.slane %v1063, 4
    %v1121 = vsel %vm94, %v1120, %v1119
    %v1122 = vrot.slane %v1064, 3
    %v1123 = vsel %vm97, %v1122, %v1121
    %v1124 = vrot.slane %v1065, 2
    %v1125 = vsel %vm100, %v1124, %v1123
    %v1126 = vrot.slane %v1066, 1
    %v1127 = vsel %vm103, %v1126, %v1125
    %1130 = vmatprep.subr.mxu0 0.0
    %1131 = vmatpush1.msra.mxu0 %v1068
    %1132 = vmatprep.subr.mxu0 0.0
    %1133 = vmatpush1.msra.mxu0 %v1069
    %1134 = vmatprep.subr.mxu0 0.0
    %1135 = vmatpush1.msra.mxu0 %v1070
    %1136 = vmatprep.subr.mxu0 0.0
    %1137 = vmatpush1.msra.mxu0 %v1071
    %1138 = vmatprep.subr.mxu0 0.0
    %1139 = vmatpush1.msra.mxu0 %v1072
    %1140 = vmatprep.subr.mxu0 0.0
    %1141 = vmatpush1.msra.mxu0 %v1073
    %1142 = vmatprep.subr.mxu0 0.0
    %1143 = vmatpush1.msra.mxu0 %v1074
    %1144 = vmatprep.subr.mxu0 0.0
    %1145 = vmatpush1.msra.mxu0 %v1075
    %1146 = vmatprep.subr.mxu0 0.0
    %1147 = vmatpush1.msra.mxu0 %v1076
    %1148 = vmatprep.subr.mxu0 0.0
    %1149 = vmatpush1.msra.mxu0 %v1077
    %1150 = vmatprep.subr.mxu0 0.0
    %1151 = vmatpush1.msra.mxu0 %v1078
    %1152 = vmatprep.subr.mxu0 0.0
    %1153 = vmatpush1.msra.mxu0 %v1079
    %1154 = vmatprep.subr.mxu0 0.0
    %1155 = vmatpush1.msra.mxu0 %v1080
    %1156 = vmatprep.subr.mxu0 0.0
    %1157 = vmatpush1.msra.mxu0 %v1081
    %1158 = vmatprep.subr.mxu0 0.0
    %1159 = vmatpush1.msra.mxu0 %v1082
    %1160 = vmatprep.subr.mxu0 0.0
    %1161 = vmatpush1.msra.mxu0 %v1083
    %1162 = vmatprep.subr.mxu0 0.0
    %1163 = vmatpush1.msra.mxu0 0.0
    %1164 = vmatprep.subr.mxu0 0.0
    %1165 = vmatpush1.msra.mxu0 0.0
    %1166 = vmatprep.subr.mxu0 0.0
    %1167 = vmatpush1.msra.mxu0 0.0
    %1168 = vmatprep.subr.mxu0 0.0
    %1169 = vmatpush1.msra.mxu0 0.0
    %1170 = vmatprep.subr.mxu0 0.0
    %1171 = vmatpush1.msra.mxu0 0.0
    %1172 = vmatprep.subr.mxu0 0.0
    %1173 = vmatpush1.msra.mxu0 0.0
    %1174 = vmatprep.subr.mxu0 0.0
    %1175 = vmatpush1.msra.mxu0 0.0
    %1176 = vmatprep.subr.mxu0 0.0
    %1177 = vmatpush1.msra.mxu0 0.0
    %1178 = vmatprep.subr.mxu0 0.0
    %1179 = vmatpush1.msra.mxu0 0.0
    %1180 = vmatprep.subr.mxu0 0.0
    %1181 = vmatpush1.msra.mxu0 0.0
    %1182 = vmatprep.subr.mxu0 0.0
    %1183 = vmatpush1.msra.mxu0 0.0
    %1184 = vmatprep.subr.mxu0 0.0
    %1185 = vmatpush1.msra.mxu0 0.0
    %1186 = vmatprep.subr.mxu0 0.0
    %1187 = vmatpush1.msra.mxu0 0.0
    %1188 = vmatprep.subr.mxu0 0.0
    %1189 = vmatpush1.msra.mxu0 0.0
    %1190 = vmatprep.subr.mxu0 0.0
    %1191 = vmatpush1.msra.mxu0 0.0
    %1192 = vmatprep.subr.mxu0 0.0
    %1193 = vmatpush1.msra.mxu0 0.0
    %1194 = vmatprep.mubr.f32.mxu0 0.0
    %1195 = vmatmul.mubr.f32.gmra.mrb[0].mxu0 %v1113
    %v1196 = vpop.f32.mrb[0].mxu0
    %v1197 = vadd.f32 0.0, %v1196
    %v1198 = vpop.f32.mrb[0].mxu0
    %1199 = vmatprep.mubr.f32.mxu0 0.0
    %1200 = vmatmul.mubr.f32.gmra.mrb[0].mxu0 %v1127
    %v1201 = vpop.f32.mrb[0].mxu0
    %v1202 = vadd.f32 0.0, %v1201
    %v1203 = vpop.f32.mrb[0].mxu0
    %1204 = vdwg.mxu0
    %v1205 = vadd.f32 %v1049, %v1197
    %v1206 = vadd.f32 %v1050, %v1202
    %vm1207 = vcmask 523264
    %1208 = vst.msk [vmem:[#allocation2] sm:$0xff] %vm1207, %v1205
    %1209 = vst.msk [vmem:[#allocation2 + $0x8] sm:$0xff] %vm1207, %v1206
    // Predicated region
    $region18: #{tpu_custom_call.1} parent=1 // pred_check
      _
    $region19: #{tpu_custom_call.1} parent=1 // pred_check_branch
      %1211 = sbr.rel (0) target = $region21
    $region20: #{tpu_custom_call.1} parent=1 // pred_region
      %s1213 = ssub.s32 256, 256
      %1214 = vsyncadd [#allocation3], %s1213
      %s1215 = sshll.u32 [#allocation2], 4
      %s1216 = int_to_ptr.vmem [resolvable:$true] %s1215
      %1221 = dma.vmem_to_hbm [thread:$0]  %s1216, 256, %s4, [#allocation3], 128, 128, 8
    $region21: #{tpu_custom_call.1} parent=1 // pred_fallthru
      _
    // Predicated region
    $region22: #{tpu_custom_call.1} parent=1 // pred_check
      _
    $region23: #{tpu_custom_call.1} parent=1 // pred_check_branch
      %1223 = sbr.rel (0) target = $region25
    $region24: #{tpu_custom_call.1} parent=1 // pred_region
      %1224 = dma.done [#allocation3], 256
    $region25: #{tpu_custom_call.1} parent=1 // pred_fallthru
      _
    %1225 = vsyncpa [#allocation3], 1

</llo_original>
